<compile_context>
chip_gen: v6e
topology: v6e:2x2x1
jax: 0.10.0
libtpu: 0.0.40
codegen_flags: <defaults>
</compile_context>

<pallas_src>
import jax
import jax.numpy as jnp
from jax.experimental import pallas as pl
from jax.experimental.pallas import tpu as pltpu


def _jkn_max_kernel(*refs):
    """refs = (*layer_out_refs, out_ref); each ref is a (tn, W) VMEM tile."""
    *in_refs, o_ref = refs
    acc = in_refs[0][...]
    for r in in_refs[1:]:          # L is small & static -> unrolled at trace time
        acc = jnp.maximum(acc, r[...])
    o_ref[...] = acc


def _round_down(x, m):
    return (x // m) * m


def _round_up(x, m):
    return ((x + m - 1) // m) * m


def jumping_knowledge_max(outs, *,
                          target_tile_bytes=4 << 20,
                          total_vmem_budget=24 << 20):
    """Elementwise max over a list of [N, F] arrays (JumpingKnowledge('max'))."""
    assert len(outs) >= 1
    N, F = outs[0].shape
    for o in outs:
        assert o.shape == (N, F), "all JK inputs must share the same shape"
    L = len(outs)

    # Promote mixed dtypes once, up front (avoids a silent downcast on store).
    dtype = jnp.result_type(*(o.dtype for o in outs))
    outs = [o if o.dtype == dtype else o.astype(dtype) for o in outs]
    itemsize = jnp.dtype(dtype).itemsize

    # Lane-dense layout: re-view the contiguous (N, F) buffers as (rows, W)
    # with W a multiple of 128 dividing N*F.  A contiguous reshape is free
    # layout plumbing; the op is elementwise so the shape is irrelevant.
    total = N * F
    rows, W = N, F
    if F % 128 != 0:
        for cand in (2048, 1024, 512, 256, 128):
            if total % cand == 0:
                rows, W = total // cand, cand
                break
    reshaped = (rows, W) != (N, F)
    if reshaped:
        outs = [o.reshape(rows, W) for o in outs]

    # Byte-budgeted row tile: per-array tile <= target_tile_bytes, and the
    # double-buffered footprint 2 x (L+1) x tile must fit the VMEM budget.
    per_array_bytes = max(W * itemsize * 8,
                          min(target_tile_bytes,
                              total_vmem_budget // (2 * (L + 1))))
    tn = max(8, _round_down(per_array_bytes // (W * itemsize), 8))
    if rows < 8:
        tn = rows                                  # full-dim block is allowed
    else:
        tn = min(tn, _round_up(rows, 8))           # no point exceeding coverage
        # v7x has 2 TensorCores: keep >= 2 row blocks when rows allow it.
        while pl.cdiv(rows, tn) < 2 and tn > 8:
            tn = max(8, _round_down(tn // 2, 8))

    grid = (pl.cdiv(rows, tn),)
    tile_spec = pl.BlockSpec((tn, W), lambda i: (i, 0))

    out = pl.pallas_call(
        _jkn_max_kernel,
        out_shape=jax.ShapeDtypeStruct((rows, W), dtype),
        grid=grid,
        in_specs=[tile_spec] * L,
        out_specs=tile_spec,
        compiler_params=pltpu.CompilerParams(
            # Row tiles are independent -> shard across TensorCores on v7x.
            dimension_semantics=("parallel",),
            # 32 MiB scoped VMEM is safe on v5e/v6e (128 MiB phys) and v7x
            # (64 MiB phys); the tile budget above leaves headroom under it.
            vmem_limit_bytes=32 << 20,
        ),
    )(*outs)

    if reshaped:
        out = out.reshape(N, F)
    return out


def jkn_forward(data, node_input, outs):
    """Mirrors JKN.forward(data, input, outs): `data` and `input` are unused."""
    del data, node_input
    return jumping_knowledge_max(outs)


if __name__ == "__main__":
    key = jax.random.PRNGKey(0)
    N, F, L = 16, 32, 4                      # nodes, hidden size, number of layer outputs
    keys = jax.random.split(key, L + 1)

    # Dummy graph `data` (ring edge index) and `input` node features, only to
    # mirror the forward(data, input, outs) signature — JKN ignores both.
    idx = jnp.arange(N, dtype=jnp.int32)
    cfg_edge_index = jnp.stack([idx, (idx + 1) % N], axis=0)   # [2, N]
    node_input = jax.random.normal(keys[-1], (N, F), jnp.float32)

    # `outs`: per-layer node embeddings accumulated by the surrounding GNN.
    outs = [jax.random.normal(keys[l], (N, F), jnp.float32) for l in range(L)]

    ref = jnp.max(jnp.stack(outs, axis=0), axis=0)

    out = jkn_forward(cfg_edge_index, node_input, outs)
    jax.block_until_ready(out)

    assert out.shape == (N, F)
    assert out.dtype == ref.dtype
    assert bool(jnp.all(jnp.isfinite(out)))
    assert bool(jnp.all(out == ref))          # max is exact -> bitwise match
    print("KERNEL_OK")
</pallas_src>

<mosaic_0001>
module attributes {stable_mosaic.version = 11 : i64} {
  func.func @_jkn_max_kernel(%arg0: i32, %arg1: memref<1x512xf32, #tpu.memory_space<vmem>>, %arg2: memref<1x512xf32, #tpu.memory_space<vmem>>, %arg3: memref<1x512xf32, #tpu.memory_space<vmem>>, %arg4: memref<1x512xf32, #tpu.memory_space<vmem>>, %arg5: memref<1x512xf32, #tpu.memory_space<vmem>>) attributes {dimension_semantics = [#tpu.dimension_semantics<parallel>], iteration_bounds = array<i64: 1>, scalar_prefetch = 0 : i64, scratch_operands = 0 : i64, tpu.core_type = #tpu.core_type<tc>, window_params = [{transform_indices = @transform_0, window_bounds = array<i64: 1, 512>}, {transform_indices = @transform_1, window_bounds = array<i64: 1, 512>}, {transform_indices = @transform_2, window_bounds = array<i64: 1, 512>}, {transform_indices = @transform_3, window_bounds = array<i64: 1, 512>}, {transform_indices = @transform_4, window_bounds = array<i64: 1, 512>}]} {
    %c0 = arith.constant 0 : index
    %c0_0 = arith.constant 0 : index
    %0 = vector.load %arg1[%c0, %c0_0] : memref<1x512xf32, #tpu.memory_space<vmem>>, vector<1x512xf32>
    %c0_1 = arith.constant 0 : index
    %c0_2 = arith.constant 0 : index
    %1 = vector.load %arg2[%c0_1, %c0_2] : memref<1x512xf32, #tpu.memory_space<vmem>>, vector<1x512xf32>
    %2 = arith.maximumf %0, %1 : vector<1x512xf32>
    %c0_3 = arith.constant 0 : index
    %c0_4 = arith.constant 0 : index
    %3 = vector.load %arg3[%c0_3, %c0_4] : memref<1x512xf32, #tpu.memory_space<vmem>>, vector<1x512xf32>
    %4 = arith.maximumf %2, %3 : vector<1x512xf32>
    %c0_5 = arith.constant 0 : index
    %c0_6 = arith.constant 0 : index
    %5 = vector.load %arg4[%c0_5, %c0_6] : memref<1x512xf32, #tpu.memory_space<vmem>>, vector<1x512xf32>
    %6 = arith.maximumf %4, %5 : vector<1x512xf32>
    %c0_7 = arith.constant 0 : index
    %c0_8 = arith.constant 0 : index
    %7 = vector.load %arg5[%c0_7, %c0_8] : memref<1x512xf32, #tpu.memory_space<vmem>>, vector<1x512xf32>
    tpu.vector_store %arg5[%c0_7, %c0_8], %6 {strides = array<i32>} : memref<1x512xf32, #tpu.memory_space<vmem>>, vector<1x512xf32>,
    return
  }
  func.func @transform_0(%arg0: i32) -> (i32, i32) {
    %c0_i32 = arith.constant 0 : i32
    %c0_i32_0 = arith.constant 0 : i32
    return %arg0, %c0_i32 : i32, i32
  }
  func.func @transform_1(%arg0: i32) -> (i32, i32) {
    %c0_i32 = arith.constant 0 : i32
    %c0_i32_0 = arith.constant 0 : i32
    return %arg0, %c0_i32 : i32, i32
  }
  func.func @transform_2(%arg0: i32) -> (i32, i32) {
    %c0_i32 = arith.constant 0 : i32
    %c0_i32_0 = arith.constant 0 : i32
    return %arg0, %c0_i32 : i32, i32
  }
  func.func @transform_3(%arg0: i32) -> (i32, i32) {
    %c0_i32 = arith.constant 0 : i32
    %c0_i32_0 = arith.constant 0 : i32
    return %arg0, %c0_i32 : i32, i32
  }
  func.func @transform_4(%arg0: i32) -> (i32, i32) {
    %c0_i32 = arith.constant 0 : i32
    %c0_i32_0 = arith.constant 0 : i32
    return %arg0, %c0_i32 : i32, i32
  }
}

</mosaic_0001>

<llo_original>
// kernel: tpu_custom_call.1
$region0: #{tpu_custom_call.1}
  #allocation0 [shape = 'u32[]', space=smem, size = 0x4, offset = 0x4, fixed_abs, tag = 'smem constant byte address 0x4 - core index']
  #allocation1 [shape = 'u32[144,128]{1,0:T(1,128)}', space=vmem, size = 0x12000, scoped, tag = 'internal scratch']
  %s0 = inlined_call_operand.hbm [shape: f32[1,512], index: 0, kind: input, shape index: {}]
  %s1 = inlined_call_operand.hbm [shape: f32[1,512], index: 1, kind: input, shape index: {}]
  %s2 = inlined_call_operand.hbm [shape: f32[1,512], index: 2, kind: input, shape index: {}]
  %s3 = inlined_call_operand.vmem [shape: f32[1,512], index: 3, kind: input, shape index: {}]
  %s4 = inlined_call_operand.hbm [shape: f32[1,512], index: 4, kind: output, shape index: {}]
  %s5 = sld [smem:[#allocation0]]
  $region38: #{tpu_custom_call.1} parent=0
    _
  %s7 = ssub.s32 1, %s5
  %s8 = scalar_select 0, %s7, %s5
  $region1: #{tpu_custom_call.1} parent=0
    #allocation2 [shape = 'u8[2048]{0}', space=vmem, size = 0x800, scoped, tag = 'input window, operand 0, single buffered']
    #allocation3 [shape = 's32[1]{0}', space=sflag, size = 0x4, scoped, tag = 'scoped memory for tpu_custom_call.1']
    #allocation4 [shape = 's32[1]{0}', space=sflag, size = 0x4, scoped, tag = 'scoped memory for tpu_custom_call.1']
    #allocation5 [shape = 'u8[2048]{0}', space=vmem, size = 0x800, scoped, tag = 'input window, operand 1, single buffered']
    #allocation6 [shape = 's32[1]{0}', space=sflag, size = 0x4, scoped, tag = 'scoped memory for tpu_custom_call.1']
    #allocation7 [shape = 'u8[2048]{0}', space=vmem, size = 0x800, scoped, tag = 'input window, operand 2, single buffered']
    #allocation8 [shape = 'u8[2048]{0}', space=vmem, size = 0x800, scoped, tag = 'output window, operand 0, single buffered']
    %9 = vsyncpa [#allocation3], 0
    %10 = vsyncpa [#allocation6], 0
    %11 = vsyncpa [#allocation4], 0
    // Predicated region
    $region2: #{tpu_custom_call.1} parent=1 // pred_check
      _
    $region3: #{tpu_custom_call.1} parent=1 // pred_check_branch
      %13 = sbr.rel (0) target = $region5
    $region4: #{tpu_custom_call.1} parent=1 // pred_region
      %s15 = ssub.s32 64, 64
      %16 = vsyncadd [#allocation3], %s15
      %s18 = sshll.u32 [#allocation2], 4
      %s19 = int_to_ptr.vmem [resolvable:$true] %s18
      %21 = dma.hbm_to_vmem [thread:$0]  %s0, 64, %s19, [#allocation3]
    $region5: #{tpu_custom_call.1} parent=1 // pred_fallthru
      _
    // Predicated region
    $region6: #{tpu_custom_call.1} parent=1 // pred_check
      _
    $region7: #{tpu_custom_call.1} parent=1 // pred_check_branch
      %23 = sbr.rel (0) target = $region9
    $region8: #{tpu_custom_call.1} parent=1 // pred_region
      %s25 = ssub.s32 64, 64
      %26 = vsyncadd [#allocation6], %s25
      %s28 = sshll.u32 [#allocation5], 4
      %s29 = int_to_ptr.vmem [resolvable:$true] %s28
      %31 = dma.hbm_to_vmem [thread:$0]  %s1, 64, %s29, [#allocation6]
    $region9: #{tpu_custom_call.1} parent=1 // pred_fallthru
      _
    // Predicated region
    $region10: #{tpu_custom_call.1} parent=1 // pred_check
      _
    $region11: #{tpu_custom_call.1} parent=1 // pred_check_branch
      %33 = sbr.rel (0) target = $region13
    $region12: #{tpu_custom_call.1} parent=1 // pred_region
      %s35 = ssub.s32 64, 64
      %36 = vsyncadd [#allocation6], %s35
      %s38 = sshll.u32 [#allocation7], 4
      %s39 = int_to_ptr.vmem [resolvable:$true] %s38
      %41 = dma.hbm_to_vmem [thread:$0]  %s2, 64, %s39, [#allocation6]
    $region13: #{tpu_custom_call.1} parent=1 // pred_fallthru
      _
    // Predicated region
    $region14: #{tpu_custom_call.1} parent=1 // pred_check
      _
    $region15: #{tpu_custom_call.1} parent=1 // pred_check_branch
      %43 = sbr.rel (0) target = $region17
    $region16: #{tpu_custom_call.1} parent=1 // pred_region
      _
    $region17: #{tpu_custom_call.1} parent=1 // pred_fallthru
      _
    // Predicated region
    $region18: #{tpu_custom_call.1} parent=1 // pred_check
      _
    $region19: #{tpu_custom_call.1} parent=1 // pred_check_branch
      %45 = sbr.rel (0) target = $region21
    $region20: #{tpu_custom_call.1} parent=1 // pred_region
      %46 = dma.done [#allocation3], 64
    $region21: #{tpu_custom_call.1} parent=1 // pred_fallthru
      _
    // Predicated region
    $region22: #{tpu_custom_call.1} parent=1 // pred_check
      _
    $region23: #{tpu_custom_call.1} parent=1 // pred_check_branch
      %48 = sbr.rel (0) target = $region25
    $region24: #{tpu_custom_call.1} parent=1 // pred_region
      %49 = dma.done [#allocation6], 64
    $region25: #{tpu_custom_call.1} parent=1 // pred_fallthru
      _
    // Predicated region
    $region26: #{tpu_custom_call.1} parent=1 // pred_check
      _
    $region27: #{tpu_custom_call.1} parent=1 // pred_check_branch
      %51 = sbr.rel (0) target = $region29
    $region28: #{tpu_custom_call.1} parent=1 // pred_region
      %52 = dma.done [#allocation6], 64
    $region29: #{tpu_custom_call.1} parent=1 // pred_fallthru
      _
    %v53 = vld [vmem:[#allocation2] sm:$0xf]
    %v54 = vld [vmem:[#allocation5] sm:$0xf]
    %v55 = vmax.f32 %v53, %v54
    %v56 = vld [vmem:[#allocation7] sm:$0xf]
    %v57 = vmax.f32 %v55, %v56
    %v58 = vld [vmem:[%s3] sm:$0xf]
    %v59 = vmax.f32 %v57, %v58
    %v60 = vlaneseq
    %vm61 = vcmp.ge.s32.totalorder %v60, 0
    %vm62 = vcmp.lt.s32.totalorder %v60, 512
    %vm63 = vmand %vm61, %vm62
    %64 = vst.msk [vmem:[#allocation8] sm:$0xf] %vm63, %v59
    // Predicated region
    $region30: #{tpu_custom_call.1} parent=1 // pred_check
      _
    $region31: #{tpu_custom_call.1} parent=1 // pred_check_branch
      %66 = sbr.rel (0) target = $region33
    $region32: #{tpu_custom_call.1} parent=1 // pred_region
      %s68 = ssub.s32 64, 64
      %69 = vsyncadd [#allocation4], %s68
      %s71 = sshll.u32 [#allocation8], 4
      %s72 = int_to_ptr.vmem [resolvable:$true] %s71
      %74 = dma.vmem_to_hbm [thread:$0]  %s72, 64, %s4, [#allocation4]
    $region33: #{tpu_custom_call.1} parent=1 // pred_fallthru
      _
    // Predicated region
    $region34: #{tpu_custom_call.1} parent=1 // pred_check
      _
    $region35: #{tpu_custom_call.1} parent=1 // pred_check_branch
      %76 = sbr.rel (0) target = $region37
    $region36: #{tpu_custom_call.1} parent=1 // pred_region
      %77 = dma.done [#allocation4], 64
    $region37: #{tpu_custom_call.1} parent=1 // pred_fallthru
      _
    %78 = vsyncpa [#allocation3], 1
    %79 = vsyncpa [#allocation6], 1
    %80 = vsyncpa [#allocation4], 1

</llo_original>
